<compile_context>
chip_gen: v6e
topology: v6e:2x2x1
jax: 0.10.0
libtpu: 0.0.40
codegen_flags: <defaults>
</compile_context>

<pallas_src>
import functools

import jax
import jax.numpy as jnp
from jax.experimental import pallas as pl
from jax.experimental.pallas import tpu as pltpu

POOL = 4  # AvgPool2d(4)


# ----------------------------------------------------------------------------------------------
# Shared in-kernel helper: sum of the four zero-padded directional squared differences.
# ----------------------------------------------------------------------------------------------
def _dir_sq_sum(d):
    """d: (bb, A, B) pooled channel-mean difference.  Returns a single scalar: the sum over all
    positions of (d - left)^2 + (d - right)^2 + (d - up)^2 + (d - down)^2 with zero padding.
    One combined reduction (no per-direction scalar sums)."""
    bb, a, b2 = d.shape
    za = jnp.zeros((bb, 1, b2), jnp.float32)
    zb = jnp.zeros((bb, a, 1), jnp.float32)
    if a > 1:
        prev_a = jnp.concatenate([za, d[:, :-1, :]], axis=1)
        next_a = jnp.concatenate([d[:, 1:, :], za], axis=1)
    else:
        prev_a, next_a = za, za
    if b2 > 1:
        prev_b = jnp.concatenate([zb, d[:, :, :-1]], axis=2)
        next_b = jnp.concatenate([d[:, :, 1:], zb], axis=2)
    else:
        prev_b, next_b = zb, zb
    e = ((d - prev_a) ** 2 + (d - next_a) ** 2
         + (d - prev_b) ** 2 + (d - next_b) ** 2)
    return jnp.sum(e)


# ----------------------------------------------------------------------------------------------
# Kernel bodies
# ----------------------------------------------------------------------------------------------
def _lspa_kernel_4d(pwt_ref, org_ref, enh_ref, out_ref):
    """NCHW path (lane-dense when W % 128 == 0).
    pwt_ref: (W, WP) pooling matrix with 1/(POOL*POOL*C) folded in (resident constant).
    org_ref / enh_ref: (bb, C, H, W) batch block.  out_ref: (1, 8, 128) partial-sum tile."""
    bb, c, h, w = org_ref.shape
    hp, wp = h // POOL, w // POOL

    # Channel-sum difference in f32 (1/C is folded into the pooling constant).
    o = org_ref[...].astype(jnp.float32)
    e = enh_ref[...].astype(jnp.float32)
    diff = jnp.sum(o - e, axis=1)                                      # (bb, h, w)

    # W-pool via one MXU matmul against the resident constant.
    # (layout-preserving reshape when h % 8 == 0; otherwise a cheap relayout of a c-fold-smaller
    #  array, still hidden under the input DMA)
    t = jnp.dot(diff.reshape(bb * h, w), pwt_ref[...],
                preferred_element_type=jnp.float32)                    # (bb*h, wp)

    # H-pool: grouped sum over POOL consecutive rows (h % POOL == 0, so groups never straddle
    # images).  No broadcasted Ph matrix and no batched einsum.
    d = jnp.sum(t.reshape(bb * hp, POOL, wp), axis=1)                  # (bb*hp, wp)
    d = d.reshape(bb, hp, wp)

    out_ref[...] = jnp.zeros_like(out_ref) + _dir_sq_sum(d)


def _lspa_kernel_flat(pc_ref, org_ref, enh_ref, out_ref, *, hp, wp):
    """Lane-dense flattened path for narrow images (W % 128 != 0, H*W % 128 == 0).
    pc_ref: (H*W, HP*WP) combined pooling matrix with 1/(POOL*POOL*C) folded in.
    org_ref / enh_ref: (bb, C, H*W) batch block.  out_ref: (1, 8, 128) partial-sum tile."""
    o = org_ref[...].astype(jnp.float32)
    e = enh_ref[...].astype(jnp.float32)
    diff = jnp.sum(o - e, axis=1)                                      # (bb, H*W), lane dense

    # Both 4x4 pools + the 1/C in one MXU matmul against the resident constant.
    d = jnp.dot(diff, pc_ref[...], preferred_element_type=jnp.float32)  # (bb, hp*wp)
    d = d.reshape(d.shape[0], hp, wp)

    out_ref[...] = jnp.zeros_like(out_ref) + _dir_sq_sum(d)


# ----------------------------------------------------------------------------------------------
# VMEM sizing (padding-aware, intermediate-aware, per-generation)
# ----------------------------------------------------------------------------------------------
def _round_up(x, m):
    return ((x + m - 1) // m) * m


def _vmem_capacity_bytes():
    try:
        return int(pltpu.get_tpu_info().vmem_capacity_bytes)
    except Exception:
        return 64 * 1024 * 1024  # conservative (v7x-sized) fallback


def _per_bb_bytes_4d(c, h, w, hp, wp, itemsize):
    """Padded VMEM bytes consumed per batch element on the NCHW path."""
    in_blk = c * _round_up(h, 8) * _round_up(w, 128) * itemsize
    by = 2 * 2 * in_blk                                        # 2 inputs x 2 pipeline buffers
    if itemsize < 4:                                           # possible f32 upcast temporaries
        by += 2 * c * _round_up(h, 8) * _round_up(w, 128) * 4
    by += 2 * _round_up(h, 8) * _round_up(w, 128) * 4          # diff (+ slack)
    by += 3 * _round_up(h, 8) * _round_up(wp, 128) * 4         # t and its regrouped copy
    by += 12 * _round_up(hp, 8) * _round_up(wp, 128) * 4       # d + shifted/squared temporaries
    return by


def _per_bb_bytes_flat(c, h, w, hp, wp, itemsize):
    """Padded VMEM bytes consumed per batch element on the flattened (lane-dense) path."""
    hw, hpwp = h * w, hp * wp
    in_blk = _round_up(c, 8) * _round_up(hw, 128) * itemsize
    by = 2 * 2 * in_blk
    if itemsize < 4:
        by += 2 * _round_up(c, 8) * _round_up(hw, 128) * 4
    by += 2 * _round_up(hw, 128) * 4                           # diff rows
    by += 12 * _round_up(hpwp, 128) * 4                        # pooled rows + slack
    by += 12 * _round_up(hp, 8) * _round_up(wp, 128) * 4       # (bb,hp,wp) view + shifts/squares
    return by


def _choose_block_batch(b, per_bb_bytes, budget_bytes):
    """Largest divisor of b that fits the padded per-element footprint into the budget, capped to
    b//2 so the grid has >= 2 steps (keeps both v7x TensorCores busy via "parallel" semantics)."""
    bb = max(1, min(b, budget_bytes // max(per_bb_bytes, 1)))
    if b >= 2:
        bb = min(bb, b // 2)
    bb = max(bb, 1)
    while b % bb:
        bb -= 1
    return bb


# ----------------------------------------------------------------------------------------------
# Wrapper
# ----------------------------------------------------------------------------------------------
def l_spa(org, enhance, *, block_batch=None, stream_dtype=None):
    """org, enhance: (B, C, H, W).  Returns scalar float32 == L_spa()(org, enhance).
    stream_dtype=jnp.bfloat16 optionally halves HBM traffic (f32 accumulation in-kernel)."""
    b, c, h, w = org.shape
    # TODO(synk): non-multiple-of-4 H/W (AvgPool2d truncation) is not handled.
    assert h % POOL == 0 and w % POOL == 0, "H and W must be multiples of 4 (AvgPool2d(4))"
    hp, wp = h // POOL, w // POOL

    if stream_dtype is not None:
        org = org.astype(stream_dtype)
        enhance = enhance.astype(stream_dtype)
    itemsize = jnp.dtype(org.dtype).itemsize

    # Per-generation VMEM policy: ~85% of physical for the compiler limit, ~70% accounted by the
    # (padding-aware) block chooser; constants are subtracted from the block budget.
    cap = _vmem_capacity_bytes()                       # 64 MiB (v7x) / 128 MiB (v5e, v6e)
    vmem_limit = max(32 * 1024 * 1024, int(cap * 0.85))
    budget = int(cap * 0.70)

    pool_scale = 1.0 / (POOL * POOL * c)               # 1/C channel mean + both 1/4 pool factors

    flat_const_bytes = _round_up(h * w, 8) * _round_up(hp * wp, 128) * 4
    use_flat = (w % 128 != 0) and ((h * w) % 128 == 0) and (flat_const_bytes <= 4 * 1024 * 1024)

    compiler_params = pltpu.CompilerParams(
        dimension_semantics=("parallel",),             # distinct per-step output tiles
        vmem_limit_bytes=vmem_limit,
    )

    if use_flat:
        # Combined (H*W -> HP*WP) pooling matrix, built once and kept resident in VMEM.
        idx = jnp.arange(h * w, dtype=jnp.int32)
        ii, jj = idx // w, idx % w
        pooled_idx = (ii // POOL) * wp + (jj // POOL)
        pc = (pooled_idx[:, None] == jnp.arange(hp * wp, dtype=jnp.int32)[None, :]
              ).astype(jnp.float32) * pool_scale                        # (H*W, HP*WP)

        per_bb = _per_bb_bytes_flat(c, h, w, hp, wp, itemsize)
        if block_batch is not None:
            assert b % block_batch == 0
            bb = block_batch
        else:
            bb = _choose_block_batch(b, per_bb, max(budget - flat_const_bytes, per_bb))
        g = b // bb

        org3 = org.reshape(b, c, h * w)                # free row-major flatten in the wrapper
        enh3 = enhance.reshape(b, c, h * w)

        partials = pl.pallas_call(
            functools.partial(_lspa_kernel_flat, hp=hp, wp=wp),
            out_shape=jax.ShapeDtypeStruct((g, 8, 128), jnp.float32),
            grid=(g,),
            in_specs=[
                pl.BlockSpec((h * w, hp * wp), lambda i: (0, 0)),       # resident constant
                pl.BlockSpec((bb, c, h * w), lambda i: (i, 0, 0)),
                pl.BlockSpec((bb, c, h * w), lambda i: (i, 0, 0)),
            ],
            out_specs=pl.BlockSpec((1, 8, 128), lambda i: (i, 0, 0)),
            compiler_params=compiler_params,
        )(pc, org3, enh3)
    else:
        # NCHW path (lane-dense whenever W % 128 == 0); W-pool matrix with the scale folded in.
        pwt = ((jnp.arange(w, dtype=jnp.int32)[:, None] // POOL
                == jnp.arange(wp, dtype=jnp.int32)[None, :]).astype(jnp.float32)
               * pool_scale)                                            # (W, WP)
        const_bytes = _round_up(w, 8) * _round_up(wp, 128) * 4

        per_bb = _per_bb_bytes_4d(c, h, w, hp, wp, itemsize)
        if block_batch is not None:
            assert b % block_batch == 0
            bb = block_batch
        else:
            bb = _choose_block_batch(b, per_bb, max(budget - const_bytes, per_bb))
        g = b // bb

        partials = pl.pallas_call(
            _lspa_kernel_4d,
            out_shape=jax.ShapeDtypeStruct((g, 8, 128), jnp.float32),
            grid=(g,),
            in_specs=[
                pl.BlockSpec((w, wp), lambda i: (0, 0)),                # resident constant
                pl.BlockSpec((bb, c, h, w), lambda i: (i, 0, 0, 0)),
                pl.BlockSpec((bb, c, h, w), lambda i: (i, 0, 0, 0)),
            ],
            out_specs=pl.BlockSpec((1, 8, 128), lambda i: (i, 0, 0)),
            compiler_params=compiler_params,
        )(pwt, org, enhance)

    # Final mean: sum of raw per-step partials * 1/(B*HP*WP), applied once here.
    return jnp.sum(partials[:, 0, 0]) * (1.0 / (b * hp * wp))


# ----------------------------------------------------------------------------------------------
# Pure-JAX reference mirroring the PyTorch forward
# ----------------------------------------------------------------------------------------------
def _l_spa_reference(org, enhance):
    om = jnp.mean(org, axis=1, keepdims=True)
    em = jnp.mean(enhance, axis=1, keepdims=True)

    def pool(x):
        bt, ct, ht, wt = x.shape
        return x.reshape(bt, ct, ht // POOL, POOL, wt // POOL, POOL).mean(axis=(3, 5))

    op, ep = pool(om), pool(em)
    d = op - ep
    pad = jnp.pad(d, ((0, 0), (0, 0), (1, 1), (1, 1)))
    dl = d - pad[:, :, 1:-1, 0:-2]
    dr = d - pad[:, :, 1:-1, 2:]
    du = d - pad[:, :, 0:-2, 1:-1]
    dd = d - pad[:, :, 2:, 1:-1]
    e = dl**2 + dr**2 + du**2 + dd**2
    return e.mean()


if __name__ == "__main__":
    key = jax.random.PRNGKey(0)
    k1, k2, k3, k4 = jax.random.split(key, 4)

    # 1) Narrow image (W=16 < 128) -> lane-dense flattened path.
    B, C, H, W = 2, 4, 16, 16
    org = jax.random.uniform(k1, (B, C, H, W), dtype=jnp.float32)
    enh = jax.random.uniform(k2, (B, C, H, W), dtype=jnp.float32)
    got = jax.block_until_ready(l_spa(org, enh))
    want = _l_spa_reference(org, enh)
    assert jnp.allclose(got, want, atol=1e-5, rtol=1e-4), (got, want)

    # 2) Wide image (W=128, multiple of 128) -> NCHW path.
    B2, C2, H2, W2 = 2, 3, 8, 128
    org2 = jax.random.uniform(k3, (B2, C2, H2, W2), dtype=jnp.float32)
    enh2 = jax.random.uniform(k4, (B2, C2, H2, W2), dtype=jnp.float32)
    got2 = jax.block_until_ready(l_spa(org2, enh2))
    want2 = _l_spa_reference(org2, enh2)
    assert jnp.allclose(got2, want2, atol=1e-5, rtol=1e-4), (got2, want2)

    # 3) bf16-streamed variant (halved HBM traffic) -> loose tolerance vs f32 reference.
    got3 = jax.block_until_ready(l_spa(org, enh, stream_dtype=jnp.bfloat16))
    assert jnp.allclose(got3, want, atol=5e-4, rtol=5e-2), (got3, want)

    print("KERNEL_OK")
</pallas_src>

<mosaic_0001>
module attributes {stable_mosaic.version = 11 : i64} {
  func.func @_lspa_kernel_flat(%arg0: i32, %arg1: memref<256x16xf32, #tpu.memory_space<vmem>>, %arg2: memref<1x4x256xf32, #tpu.memory_space<vmem>>, %arg3: memref<1x4x256xf32, #tpu.memory_space<vmem>>, %arg4: memref<1x8x128xf32, #tpu.memory_space<vmem>>) attributes {dimension_semantics = [#tpu.dimension_semantics<parallel>], iteration_bounds = array<i64: 2>, scalar_prefetch = 0 : i64, scratch_operands = 0 : i64, tpu.core_type = #tpu.core_type<tc>, window_params = [{pipeline_mode = #tpu.pipeline_mode<synchronous>, transform_indices = @transform_0, window_bounds = array<i64: 256, 16>}, {transform_indices = @transform_1, window_bounds = array<i64: 1, 4, 256>}, {transform_indices = @transform_2, window_bounds = array<i64: 1, 4, 256>}, {transform_indices = @transform_3, window_bounds = array<i64: 1, 8, 128>}]} {
    %c0 = arith.constant 0 : index
    %c0_0 = arith.constant 0 : index
    %c0_1 = arith.constant 0 : index
    %0 = vector.load %arg2[%c0, %c0_0, %c0_1] : memref<1x4x256xf32, #tpu.memory_space<vmem>>, vector<1x4x256xf32>
    %c0_2 = arith.constant 0 : index
    %c0_3 = arith.constant 0 : index
    %c0_4 = arith.constant 0 : index
    %1 = vector.load %arg3[%c0_2, %c0_3, %c0_4] : memref<1x4x256xf32, #tpu.memory_space<vmem>>, vector<1x4x256xf32>
    %2 = arith.subf %0, %1 : vector<1x4x256xf32>
    %cst = arith.constant dense<0.000000e+00> : vector<1x256xf32>
    %3 = vector.multi_reduction <add>, %2, %cst [1] : vector<1x4x256xf32> to vector<1x256xf32>
    %c0_5 = arith.constant 0 : index
    %c0_6 = arith.constant 0 : index
    %4 = vector.load %arg1[%c0_5, %c0_6] : memref<256x16xf32, #tpu.memory_space<vmem>>, vector<256x16xf32>
    %cst_7 = arith.constant dense<0.000000e+00> : vector<1x16xf32>
    %5 = tpu.matmul %3, %4, %cst_7 {dimension_numbers = #tpu.dot_dimension_numbers<[1], [0], [0], [1], [0, 0, 1, 1], [], []>} : vector<1x256xf32>, vector<256x16xf32>, vector<1x16xf32> -> vector<1x16xf32>
    %6 = vector.shape_cast %5 : vector<1x16xf32> to vector<1x4x4xf32>
    %cst_8 = arith.constant 0.000000e+00 : f32
    %7 = vector.broadcast %cst_8 : f32 to vector<1x8x128xf32>
    %cst_9 = arith.constant 0.000000e+00 : f32
    %8 = vector.broadcast %cst_9 : f32 to vector<1x1x4xf32>
    %cst_10 = arith.constant 0.000000e+00 : f32
    %9 = vector.broadcast %cst_10 : f32 to vector<1x4x1xf32>
    %10 = vector.extract_strided_slice %6 {offsets = [0, 0, 0], sizes = [1, 3, 4], strides = [1, 1, 1]} : vector<1x4x4xf32> to vector<1x3x4xf32>
    %11 = tpu.concatenate %8, %10 in 1 : vector<1x1x4xf32>, vector<1x3x4xf32> -> vector<1x4x4xf32>
    %12 = vector.extract_strided_slice %6 {offsets = [0, 1, 0], sizes = [1, 3, 4], strides = [1, 1, 1]} : vector<1x4x4xf32> to vector<1x3x4xf32>
    %13 = tpu.concatenate %12, %8 in 1 : vector<1x3x4xf32>, vector<1x1x4xf32> -> vector<1x4x4xf32>
    %14 = vector.extract_strided_slice %6 {offsets = [0, 0, 0], sizes = [1, 4, 3], strides = [1, 1, 1]} : vector<1x4x4xf32> to vector<1x4x3xf32>
    %15 = tpu.concatenate %9, %14 in 2 : vector<1x4x1xf32>, vector<1x4x3xf32> -> vector<1x4x4xf32>
    %16 = vector.extract_strided_slice %6 {offsets = [0, 0, 1], sizes = [1, 4, 3], strides = [1, 1, 1]} : vector<1x4x4xf32> to vector<1x4x3xf32>
    %17 = tpu.concatenate %16, %9 in 2 : vector<1x4x3xf32>, vector<1x4x1xf32> -> vector<1x4x4xf32>
    %18 = arith.subf %6, %11 : vector<1x4x4xf32>
    %19 = arith.mulf %18, %18 : vector<1x4x4xf32>
    %20 = arith.subf %6, %13 : vector<1x4x4xf32>
    %21 = arith.mulf %20, %20 : vector<1x4x4xf32>
    %22 = arith.addf %19, %21 : vector<1x4x4xf32>
    %23 = arith.subf %6, %15 : vector<1x4x4xf32>
    %24 = arith.mulf %23, %23 : vector<1x4x4xf32>
    %25 = arith.addf %22, %24 : vector<1x4x4xf32>
    %26 = arith.subf %6, %17 : vector<1x4x4xf32>
    %27 = arith.mulf %26, %26 : vector<1x4x4xf32>
    %28 = arith.addf %25, %27 : vector<1x4x4xf32>
    %29 = vector.shape_cast %28 : vector<1x4x4xf32> to vector<1x1x4x4xf32>
    %cst_11 = arith.constant dense<0.000000e+00> : vector<1xf32>
    %30 = vector.multi_reduction <add>, %29, %cst_11 [1, 2, 3] : vector<1x1x4x4xf32> to vector<1xf32>
    %31 = vector.shape_cast %30 : vector<1xf32> to vector<1x1x1x1xf32>
    %32 = vector.extract %31[0, 0, 0, 0] : f32 from vector<1x1x1x1xf32>
    %33 = vector.broadcast %32 : f32 to vector<1x8x128xf32>
    %34 = arith.addf %7, %33 : vector<1x8x128xf32>
    %c0_12 = arith.constant 0 : index
    %c0_13 = arith.constant 0 : index
    %c0_14 = arith.constant 0 : index
    %35 = vector.load %arg4[%c0_12, %c0_13, %c0_14] : memref<1x8x128xf32, #tpu.memory_space<vmem>>, vector<1x8x128xf32>
    tpu.vector_store %arg4[%c0_12, %c0_13, %c0_14], %34 {strides = array<i32>} : memref<1x8x128xf32, #tpu.memory_space<vmem>>, vector<1x8x128xf32>,
    return
  }
  func.func @transform_0(%arg0: i32) -> (i32, i32) {
    %c0_i32 = arith.constant 0 : i32
    %c0_i32_0 = arith.constant 0 : i32
    %c0_i32_1 = arith.constant 0 : i32
    return %c0_i32, %c0_i32_0 : i32, i32
  }
  func.func @transform_1(%arg0: i32) -> (i32, i32, i32) {
    %c0_i32 = arith.constant 0 : i32
    %c0_i32_0 = arith.constant 0 : i32
    %c0_i32_1 = arith.constant 0 : i32
    return %arg0, %c0_i32, %c0_i32_0 : i32, i32, i32
  }
  func.func @transform_2(%arg0: i32) -> (i32, i32, i32) {
    %c0_i32 = arith.constant 0 : i32
    %c0_i32_0 = arith.constant 0 : i32
    %c0_i32_1 = arith.constant 0 : i32
    return %arg0, %c0_i32, %c0_i32_0 : i32, i32, i32
  }
  func.func @transform_3(%arg0: i32) -> (i32, i32, i32) {
    %c0_i32 = arith.constant 0 : i32
    %c0_i32_0 = arith.constant 0 : i32
    %c0_i32_1 = arith.constant 0 : i32
    return %arg0, %c0_i32, %c0_i32_0 : i32, i32, i32
  }
}

</mosaic_0001>

<llo_original>
// kernel: tpu_custom_call.1
$region0: #{tpu_custom_call.1}
  #allocation0 [shape = 'u32[]', space=smem, size = 0x4, offset = 0x4, fixed_abs, tag = 'smem constant byte address 0x4 - core index']
  #allocation1 [shape = 'u32[144,128]{1,0:T(1,128)}', space=vmem, size = 0x12000, scoped, tag = 'internal scratch']
  %s0 = inlined_call_operand.vmem [shape: f32[256,16], index: 0, kind: input, shape index: {}]
  %s1 = inlined_call_operand.vmem [shape: f32[2,4,256], index: 1, kind: input, shape index: {}]
  %s2 = inlined_call_operand.vmem [shape: f32[2,4,256], index: 2, kind: input, shape index: {}]
  %s3 = inlined_call_operand.hbm [shape: f32[2,8,128], index: 3, kind: output, shape index: {}]
  %s4 = sld [smem:[#allocation0]]
  $region45: #{tpu_custom_call.1} parent=0
    _
  %s6 = ssub.s32 1, %s4
  %s7 = scalar_select 0, %s6, %s4
  $region1: #{tpu_custom_call.1} parent=0
    #allocation2 [shape = 'u8[8192]{0}', space=vmem, size = 0x2000, scoped, tag = 'output window, operand 0']
    #allocation3 [shape = 's32[2]{0}', space=sflag, size = 0x8, scoped, tag = 'scoped memory for tpu_custom_call.1']
    %8 = vsyncpa [#allocation3], 0
    %s9 = scalar_lea.sflag [#allocation3], 1
    %10 = vsyncpa %s9, 0
    loop: start=0, step=1, limit=4
    $region2: #{tpu_custom_call.1} parent=1 // loop_pre_header
      _
    $region3: #{tpu_custom_call.1} parent=1 // loop_header
      %s12 = sphi 0, %s16
      %p13 = scmp.ge.s32.totalorder %s12, 4
      %s20 = sphi 0, %s20
      %s22 = sphi 0, %s20
      %s23 = sphi 0, %s22
      %s37 = sphi 0, %s23
      %s43 = sphi 0, %s45
      %s46 = sphi 0, %s43
      %s47 = sphi 0, %s46
      %s63 = sphi 0, %s47
      %s69 = sphi 0, %s71
      %s72 = sphi 0, %s69
      %s73 = sphi 0, %s72
      %s89 = sphi 0, %s73
      %s95 = sphi 0, %s97
      %s98 = sphi 0, %s95
      %s99 = sphi 0, %s98
      %s115 = sphi 0, %s99
    $region4: #{tpu_custom_call.1} parent=1 // loop_header_branch
      %15 = sbr.rel (%p13) target = $region8
    $region5: #{tpu_custom_call.1} parent=1 // loop_body
      %s17 = ssub.s32 %s12, 1
      %s18 = ssub.s32 %s12, 2
      %s19 = sadd.s32 %s12, 1
      %s21 = sadd.s32 %s20, 1
      %p24 = scmp.eq.s32.totalorder %s12, 1
      %p25 = scmp.ne.s32.totalorder %s20, %s22
      %p26 = scmp.eq.s32.totalorder %s12, 0
      %p27 = por %p25, %p26
      %p28 = scmp.ne.s32.totalorder %s20, %s22
      %p29 = scmp.eq.s32.totalorder %s17, 1
      %p30 = por %p28, %p29
      %p31 = scmp.ne.s32.totalorder %s22, %s23
      %p32 = scmp.eq.s32.totalorder %s17, 0
      %p33 = por %p31, %p32
      %p34 = scmp.ne.s32.totalorder %s22, %s23
      %p35 = scmp.eq.s32.totalorder %s18, 1
      %p36 = por %p34, %p35
      %p38 = scmp.ne.s32.totalorder %s23, %s37
      %p39 = scmp.eq.s32.totalorder %s18, 0
      %p40 = por %p38, %p39
      %s41 = ssub.s32 %s12, %s19
      %p42 = scmp.eq.s32.totalorder %s41, 0
      %s44 = sadd.s32 %s43, 1
      %s45 = scalar_select %p42, %s43, %s44
      %p48 = pneg %p42
      %p49 = scmp.eq.s32.totalorder %s12, 1
      %p50 = por %p48, %p49
      %p51 = scmp.ne.s32.totalorder %s43, %s46
      %p52 = scmp.eq.s32.totalorder %s12, 0
      %p53 = por %p51, %p52
      %p54 = scmp.ne.s32.totalorder %s43, %s46
      %p55 = scmp.eq.s32.totalorder %s17, 1
      %p56 = por %p54, %p55
      %p57 = scmp.ne.s32.totalorder %s46, %s47
      %p58 = scmp.eq.s32.totalorder %s17, 0
      %p59 = por %p57, %p58
      %p60 = scmp.ne.s32.totalorder %s46, %s47
      %p61 = scmp.eq.s32.totalorder %s18, 1
      %p62 = por %p60, %p61
      %p64 = scmp.ne.s32.totalorder %s47, %s63
      %p65 = scmp.eq.s32.totalorder %s18, 0
      %p66 = por %p64, %p65
      %s67 = ssub.s32 %s12, %s19
      %p68 = scmp.eq.s32.totalorder %s67, 0
      %s70 = sadd.s32 %s69, 1
      %s71 = scalar_select %p68, %s69, %s70
      %p74 = pneg %p68
      %p75 = scmp.eq.s32.totalorder %s12, 1
      %p76 = por %p74, %p75
      %p77 = scmp.ne.s32.totalorder %s69, %s72
      %p78 = scmp.eq.s32.totalorder %s12, 0
      %p79 = por %p77, %p78
      %p80 = scmp.ne.s32.totalorder %s69, %s72
      %p81 = scmp.eq.s32.totalorder %s17, 1
      %p82 = por %p80, %p81
      %p83 = scmp.ne.s32.totalorder %s72, %s73
      %p84 = scmp.eq.s32.totalorder %s17, 0
      %p85 = por %p83, %p84
      %p86 = scmp.ne.s32.totalorder %s72, %s73
      %p87 = scmp.eq.s32.totalorder %s18, 1
      %p88 = por %p86, %p87
      %p90 = scmp.ne.s32.totalorder %s73, %s89
      %p91 = scmp.eq.s32.totalorder %s18, 0
      %p92 = por %p90, %p91
      %s93 = ssub.s32 %s12, %s19
      %p94 = scmp.eq.s32.totalorder %s93, 0
      %s96 = sadd.s32 %s95, 1
      %s97 = scalar_select %p94, %s95, %s96
      %p100 = pneg %p94
      %p101 = scmp.eq.s32.totalorder %s12, 1
      %p102 = por %p100, %p101
      %p103 = scmp.ne.s32.totalorder %s95, %s98
      %p104 = scmp.eq.s32.totalorder %s12, 0
      %p105 = por %p103, %p104
      %p106 = scmp.ne.s32.totalorder %s95, %s98
      %p107 = scmp.eq.s32.totalorder %s17, 1
      %p108 = por %p106, %p107
      %p109 = scmp.ne.s32.totalorder %s98, %s99
      %p110 = scmp.eq.s32.totalorder %s17, 0
      %p111 = por %p109, %p110
      %p112 = scmp.ne.s32.totalorder %s98, %s99
      %p113 = scmp.eq.s32.totalorder %s18, 1
      %p114 = por %p112, %p113
      %p116 = scmp.ne.s32.totalorder %s99, %s115
      %p117 = scmp.eq.s32.totalorder %s18, 0
      %p118 = por %p116, %p117
      %p119 = scmp.le.s32.totalorder 1, %s12
      %p120 = scmp.lt.s32.totalorder %s12, 3
      %p121 = pnand %p119, %p120
      %p122 = pneg %p121
      // Predicated region
      $region9: #{tpu_custom_call.1} parent=5 // pred_check
        _
      $region10: #{tpu_custom_call.1} parent=5 // pred_check_branch
        %124 = sbr.rel (%p121) target = $region12
      $region11: #{tpu_custom_call.1} parent=5 // pred_region
        %s125 = ssub.s32 %s12, 1
        // Predicated region
        $region13: #{tpu_custom_call.1} parent=11 // pred_check
          %p126 = pneg %p33
        $region14: #{tpu_custom_call.1} parent=11 // pred_check_branch
          %128 = sbr.rel (%p126) target = $region16
        $region15: #{tpu_custom_call.1} parent=11 // pred_region
          _
        $region16: #{tpu_custom_call.1} parent=11 // pred_fallthru
          _
      $region12: #{tpu_custom_call.1} parent=5 // pred_fallthru
        _
      %p129 = scmp.lt.s32.totalorder %s12, 2
      // Predicated region
      $region17: #{tpu_custom_call.1} parent=5 // pred_check
        %p130 = pneg %p129
      $region18: #{tpu_custom_call.1} parent=5 // pred_check_branch
        %132 = sbr.rel (%p130) target = $region20
      $region19: #{tpu_custom_call.1} parent=5 // pred_region
        // Predicated region
        $region21: #{tpu_custom_call.1} parent=19 // pred_check
          %p133 = pneg %p53
        $region22: #{tpu_custom_call.1} parent=19 // pred_check_branch
          %135 = sbr.rel (%p133) target = $region24
        $region23: #{tpu_custom_call.1} parent=19 // pred_region
          %p136 = scmp.lt.s32.totalorder %s12, 1
          %s137 = scalar_select %p136, %s12, 1
          %s138 = smul.addr %s137, 2
          %s139 = smul.addr %s138, 4
          %s140 = scalar_lea.vmem %s1, %s139
        $region24: #{tpu_custom_call.1} parent=19 // pred_fallthru
          _
        // Predicated region
        $region25: #{tpu_custom_call.1} parent=19 // pred_check
          %p141 = pneg %p79
        $region26: #{tpu_custom_call.1} parent=19 // pred_check_branch
          %143 = sbr.rel (%p141) target = $region28
        $region27: #{tpu_custom_call.1} parent=19 // pred_region
          %p144 = scmp.lt.s32.totalorder %s12, 1
          %s145 = scalar_select %p144, %s12, 1
          %s146 = smul.addr %s145, 2
          %s147 = smul.addr %s146, 4
          %s148 = scalar_lea.vmem %s2, %s147
        $region28: #{tpu_custom_call.1} parent=19 // pred_fallthru
          _
      $region20: #{tpu_custom_call.1} parent=5 // pred_fallthru
        _
      %p149 = scmp.le.s32.totalorder 1, %s12
      %p150 = scmp.lt.s32.totalorder %s12, 3
      %p151 = pnand %p149, %p150
      %p152 = pneg %p151
      // Predicated region
      $region29: #{tpu_custom_call.1} parent=5 // pred_check
        _
      $region30: #{tpu_custom_call.1} parent=5 // pred_check_branch
        %154 = sbr.rel (%p151) target = $region32
      $region31: #{tpu_custom_call.1} parent=5 // pred_region
        %s155 = ssub.s32 %s12, 1
        %p156 = pneg %p33
        %p157 = pneg %p30
        %p158 = scmp.lt.s32.totalorder %s17, 1
        %s159 = scalar_select %p158, %s17, 1
        %s160 = smul.addr %s159, 2
        %s161 = smul.addr %s160, 4
        %s162 = scalar_lea.vmem %s1, %s161
        %p163 = pneg %p59
        %p164 = pneg %p56
        %p165 = scmp.lt.s32.totalorder %s17, 1
        %s166 = scalar_select %p165, %s17, 1
        %s167 = smul.addr %s166, 2
        %s168 = smul.addr %s167, 4
        %s169 = scalar_lea.vmem %s2, %s168
        %p170 = pneg %p85
        %p171 = pneg %p82
        %p172 = pneg %p111
        %p173 = pneg %p108
        %s174 = sand.u32 %s98, 1
        %s175 = scalar_lea.sflag [#allocation3], %s174
        %s176 = sand.u32 %s98, 1
        %s177 = smul.addr %s176, 8
        %s178 = scalar_lea.vmem [#allocation2], %s177
        %p179 = scmp.lt.s32.totalorder %s17, 1
        %s180 = scalar_select %p179, %s17, 1
        %s181 = smul.addr %s180, 2
        %s182 = smul.addr %s181, 4
        %s183 = scalar_lea.vmem %s1, %s182
        %p184 = scmp.lt.s32.totalorder %s17, 1
        %s185 = scalar_select %p184, %s17, 1
        %s186 = smul.addr %s185, 2
        %s187 = smul.addr %s186, 4
        %s188 = scalar_lea.vmem %s2, %s187
        %v189 = vld [vmem:[%s183] sm:$0xff]
        %v190 = vld [vmem:[%s188] sm:$0xff]
        %v191 = vsub.f32 %v189, %v190
        %v193 = vcombine.high %v191, %v191
        %vm195 = vcmask 1043456
        %v196 = vsel %vm195, %v191, 0.0
        %v197 = vrot.slane %v196, 4
        %v198 = vadd.f32 %v196, %v197
        %v199 = vrot.slane %v198, 2
        %v200 = vadd.f32 %v198, %v199
        %v201 = vrot.slane %v200, 1
        %v202 = vadd.f32 %v200, %v201
        %v203 = vsel %vm195, %v193, 0.0
        %v204 = vrot.slane %v203, 4
        %v205 = vadd.f32 %v203, %v204
        %v206 = vrot.slane %v205, 2
        %v207 = vadd.f32 %v205, %v206
        %v208 = vrot.slane %v207, 1
        %v209 = vadd.f32 %v207, %v208
        %v210 = vld [vmem:[%s0] sm:$0xff]
        %v211 = vld [vmem:[%s0 + $0x8] sm:$0xff]
        %v212 = vld [vmem:[%s0 + $0x10] sm:$0xff]
        %v213 = vld [vmem:[%s0 + $0x18] sm:$0xff]
        %v214 = vld [vmem:[%s0 + $0x20] sm:$0xff]
        %v215 = vld [vmem:[%s0 + $0x28] sm:$0xff]
        %v216 = vld [vmem:[%s0 + $0x30] sm:$0xff]
        %v217 = vld [vmem:[%s0 + $0x38] sm:$0xff]
        %v218 = vld [vmem:[%s0 + $0x40] sm:$0xff]
        %v219 = vld [vmem:[%s0 + $0x48] sm:$0xff]
        %v220 = vld [vmem:[%s0 + $0x50] sm:$0xff]
        %v221 = vld [vmem:[%s0 + $0x58] sm:$0xff]
        %v222 = vld [vmem:[%s0 + $0x60] sm:$0xff]
        %v223 = vld [vmem:[%s0 + $0x68] sm:$0xff]
        %v224 = vld [vmem:[%s0 + $0x70] sm:$0xff]
        %v225 = vld [vmem:[%s0 + $0x78] sm:$0xff]
        %v226 = vld [vmem:[%s0 + $0x80] sm:$0xff]
        %v227 = vld [vmem:[%s0 + $0x88] sm:$0xff]
        %v228 = vld [vmem:[%s0 + $0x90] sm:$0xff]
        %v229 = vld [vmem:[%s0 + $0x98] sm:$0xff]
        %v230 = vld [vmem:[%s0 + $0xa0] sm:$0xff]
        %v231 = vld [vmem:[%s0 + $0xa8] sm:$0xff]
        %v232 = vld [vmem:[%s0 + $0xb0] sm:$0xff]
        %v233 = vld [vmem:[%s0 + $0xb8] sm:$0xff]
        %v234 = vld [vmem:[%s0 + $0xc0] sm:$0xff]
        %v235 = vld [vmem:[%s0 + $0xc8] sm:$0xff]
        %v236 = vld [vmem:[%s0 + $0xd0] sm:$0xff]
        %v237 = vld [vmem:[%s0 + $0xd8] sm:$0xff]
        %v238 = vld [vmem:[%s0 + $0xe0] sm:$0xff]
        %v239 = vld [vmem:[%s0 + $0xe8] sm:$0xff]
        %v240 = vld [vmem:[%s0 + $0xf0] sm:$0xff]
        %v241 = vld [vmem:[%s0 + $0xf8] sm:$0xff]
        %242 = vmatprep.subr.mxu0 0.0
        %243 = vmatpush1.msra.mxu0 %v225
        %244 = vmatprep.subr.mxu0 0.0
        %245 = vmatpush1.msra.mxu0 %v224
        %246 = vmatprep.subr.mxu0 0.0
        %247 = vmatpush1.msra.mxu0 %v223
        %248 = vmatprep.subr.mxu0 0.0
        %249 = vmatpush1.msra.mxu0 %v222
        %250 = vmatprep.subr.mxu0 0.0
        %251 = vmatpush1.msra.mxu0 %v221
        %252 = vmatprep.subr.mxu0 0.0
        %253 = vmatpush1.msra.mxu0 %v220
        %254 = vmatprep.subr.mxu0 0.0
        %255 = vmatpush1.msra.mxu0 %v219
        %256 = vmatprep.subr.mxu0 0.0
        %257 = vmatpush1.msra.mxu0 %v218
        %258 = vmatprep.subr.mxu0 0.0
        %259 = vmatpush1.msra.mxu0 %v217
        %260 = vmatprep.subr.mxu0 0.0
        %261 = vmatpush1.msra.mxu0 %v216
        %262 = vmatprep.subr.mxu0 0.0
        %263 = vmatpush1.msra.mxu0 %v215
        %264 = vmatprep.subr.mxu0 0.0
        %265 = vmatpush1.msra.mxu0 %v214
        %266 = vmatprep.subr.mxu0 0.0
        %267 = vmatpush1.msra.mxu0 %v213
        %268 = vmatprep.subr.mxu0 0.0
        %269 = vmatpush1.msra.mxu0 %v212
        %270 = vmatprep.subr.mxu0 0.0
        %271 = vmatpush1.msra.mxu0 %v211
        %272 = vmatprep.subr.mxu0 0.0
        %273 = vmatpush1.msra.mxu0 %v210
        %274 = vmatprep.subr.mxu0 0.0
        %275 = vmatpush2.msra.mxu0 %v241
        %276 = vmatprep.subr.mxu0 0.0
        %277 = vmatpush2.msra.mxu0 %v240
        %278 = vmatprep.subr.mxu0 0.0
        %279 = vmatpush2.msra.mxu0 %v239
        %280 = vmatprep.subr.mxu0 0.0
        %281 = vmatpush2.msra.mxu0 %v238
        %282 = vmatprep.subr.mxu0 0.0
        %283 = vmatpush2.msra.mxu0 %v237
        %284 = vmatprep.subr.mxu0 0.0
        %285 = vmatpush2.msra.mxu0 %v236
        %286 = vmatprep.subr.mxu0 0.0
        %287 = vmatpush2.msra.mxu0 %v235
        %288 = vmatprep.subr.mxu0 0.0
        %289 = vmatpush2.msra.mxu0 %v234
        %290 = vmatprep.subr.mxu0 0.0
        %291 = vmatpush2.msra.mxu0 %v233
        %292 = vmatprep.subr.mxu0 0.0
        %293 = vmatpush2.msra.mxu0 %v232
        %294 = vmatprep.subr.mxu0 0.0
        %295 = vmatpush2.msra.mxu0 %v231
        %296 = vmatprep.subr.mxu0 0.0
        %297 = vmatpush2.msra.mxu0 %v230
        %298 = vmatprep.subr.mxu0 0.0
        %299 = vmatpush2.msra.mxu0 %v229
        %300 = vmatprep.subr.mxu0 0.0
        %301 = vmatpush2.msra.mxu0 %v228
        %302 = vmatprep.subr.mxu0 0.0
        %303 = vmatpush2.msra.mxu0 %v227
        %304 = vmatprep.subr.mxu0 0.0
        %305 = vmatpush2.msra.mxu0 %v226
        %306 = vmatprep.mubr.f32.mxu0 %v209
        %307 = vmatmul.mubr.f32.gmra.mxu0 %v202
        %v308 = vpop.f32.mrf.mxu0
        %v309 = vadd.f32 0.0, %v308
        %v310 = vpop.f32.mrf.mxu0
        %311 = vdwg.mxu0
        %313 = vrot.lane.b32.xlu0 %v309, 124
        %v314 = vpop.permute.xlu0 %313
        %316 = vrot.lane.b32.xlu0 %v309, 120
        %v317 = vpop.permute.xlu0 %316
        %319 = vrot.lane.b32.xlu0 %v309, 116
        %v320 = vpop.permute.xlu0 %319
        %v322 = vcombine.low %v309, %v317
        %v324 = vunpack.c.l.s4 1983009808
        %v325 = vunpack.c.0.s8 %v324
        %v326 = vlaneseq
        %v327 = vshrl.u32 %v326, 7
        %v328 = vsub.s32 %v325, %v327
        %v329 = vrot.slane %v322, %v328
        %v330 = vcombine.low %v314, %v320
        %v332 = vunpack.c.l.s4 1983009808
        %v333 = vunpack.c.0.s8 %v332
        %v334 = vlaneseq
        %v335 = vshrl.u32 %v334, 7
        %v336 = vsub.s32 %v333, %v335
        %v337 = vrot.slane %v330, %v336
        %v338 = vcombine.low %v329, %v337
        %v340 = vunpack.c.l.s4 1934713408
        %v341 = vunpack.c.0.s8 %v340
        %v342 = vlaneseq
        %v343 = vshrl.u32 %v342, 7
        %v344 = vsub.s32 %v341, %v343
        %v345 = vrot.slane %v338, %v344
        %v347 = vrot.slane %v345, 7
        %vm349 = vcmask 1040384
        %v350 = vsel %vm349, 0.0, %v347
        %v351 = vrot.slane %v345, 1
        %vm353 = vcmask 1042432
        %v354 = vsel %vm353, %v351, 0.0
        %355 = vrot.lane.b32.xlu0 %v345, 1
        %v356 = vpop.permute.xlu0 %355
        %vm358 = vcmask 7168
        %v359 = vsel %vm358, 0.0, %v356
        %360 = vrot.lane.b32.xlu0 %v345, 127
        %v361 = vpop.permute.xlu0 %360
        %vm363 = vcmask 23552
        %v364 = vsel %vm363, %v361, 0.0
        %v365 = vsub.f32 %v345, %v350
        %v366 = vmul.f32 %v365, %v365
        %v367 = vsub.f32 %v345, %v354
        %v368 = vmul.f32 %v367, %v367
        %v369 = vadd.f32 %v366, %v368
        %v370 = vsub.f32 %v345, %v359
        %v371 = vmul.f32 %v370, %v370
        %v372 = vadd.f32 %v369, %v371
        %v373 = vsub.f32 %v345, %v364
        %v374 = vmul.f32 %v373, %v373
        %v375 = vadd.f32 %v372, %v374
        %vm376 = vcmask 27648
        %v377 = vsel %vm376, %v375, 0.0
        %378 = vadd.xlane.f32.xlu0 %v377
        %v379 = vpop.xlane.xlu0 %378
        %v380 = vrot.slane %v379, 4
        %v381 = vadd.f32 %v379, %v380
        %v382 = vrot.slane %v381, 2
        %v383 = vadd.f32 %v381, %v382
        %v384 = vrot.slane %v383, 1
        %v385 = vadd.f32 %v383, %v384
        %s386 = vtos %v385
        %v387 = vstv %s386
        %v388 = vadd.f32 %v387, 0.0
        %389 = vst [vmem:[%s178] sm:$0xff] %v388
        %s390 = sand.u32 %s98, 1
        %s391 = scalar_lea.sflag [#allocation3], %s390
        %s392 = sand.u32 %s98, 1
        %s393 = smul.addr %s392, 8
        %s394 = scalar_lea.vmem [#allocation2], %s393
        // Predicated region
        $region33: #{tpu_custom_call.1} parent=31 // pred_check
          %p395 = pneg %p108
        $region34: #{tpu_custom_call.1} parent=31 // pred_check_branch
          %397 = sbr.rel (%p395) target = $region36
        $region35: #{tpu_custom_call.1} parent=31 // pred_region
          %s399 = ssub.s32 128, 128
          %400 = vsyncadd %s391, %s399
          %s401 = smul.addr %s17, 128
          %s402 = scalar_lea.hbm %s3, %s401
          %s404 = sshll.u32 %s394, 4
          %s405 = int_to_ptr.vmem [resolvable:$true] %s404
          %407 = dma.vmem_to_hbm [thread:$0]  %s405, 128, %s402, %s391
        $region36: #{tpu_custom_call.1} parent=31 // pred_fallthru
          _
      $region32: #{tpu_custom_call.1} parent=5 // pred_fallthru
        _
      %p408 = scmp.le.s32.totalorder 2, %s12
      // Predicated region
      $region37: #{tpu_custom_call.1} parent=5 // pred_check
        %p409 = pneg %p408
      $region38: #{tpu_custom_call.1} parent=5 // pred_check_branch
        %411 = sbr.rel (%p409) target = $region40
      $region39: #{tpu_custom_call.1} parent=5 // pred_region
        %s412 = ssub.s32 %s12, 2
        // Predicated region
        $region41: #{tpu_custom_call.1} parent=39 // pred_check
          %p413 = pneg %p114
        $region42: #{tpu_custom_call.1} parent=39 // pred_check_branch
          %415 = sbr.rel (%p413) target = $region44
        $region43: #{tpu_custom_call.1} parent=39 // pred_region
          %s416 = sand.u32 %s99, 1
          %s417 = scalar_lea.sflag [#allocation3], %s416
          %s418 = sand.u32 %s99, 1
          %s419 = smul.addr %s418, 8
          %s420 = scalar_lea.vmem [#allocation2], %s419
          %421 = dma.done %s417, 128
        $region44: #{tpu_custom_call.1} parent=39 // pred_fallthru
          _
      $region40: #{tpu_custom_call.1} parent=5 // pred_fallthru
        _
    $region6: #{tpu_custom_call.1} parent=1 // loop_footer
      %s16 = sadd.s32 1, %s12
    $region7: #{tpu_custom_call.1} parent=1 // loop_footer_branch
      %11 = sbr.rel target = $region3
    $region8: #{tpu_custom_call.1} parent=1 // loop_exit
      _
    %422 = vsyncpa [#allocation3], 1
    %s423 = scalar_lea.sflag [#allocation3], 1
    %424 = vsyncpa %s423, 1

</llo_original>
